<compile_context>
chip_gen: v5e
topology: v5e:2x2
jax: 0.10.0
libtpu: 0.0.40
codegen_flags: <defaults>
</compile_context>

<pallas_src>
import jax
import jax.numpy as jnp
from jax import lax
from jax.experimental import pallas as pl
from jax.experimental.pallas import tpu as pltpu


def _round_up(x, m):
    return (x + m - 1) // m * m


def _pick_tile(dim, cap):
    """Smallest multiple of 128 covering `dim`, capped at `cap` (cap is a multiple of 128)."""
    return min(_round_up(max(dim, 1), 128), cap)


def _shrink_128(t):
    """Next smaller tile size: stays a multiple of 128, floors at 128."""
    return max(128, _round_up(t // 2, 128)) if t > 128 else 128


def _vmem_bytes(o_pad, d_tile, e_tile, n_tile, itemsize, use_acc_scratch):
    """Rough resident-VMEM estimate for the chosen tiles (double-buffered blocks)."""
    x_blocks = 2 * n_tile * d_tile * itemsize        # boundary_x input block
    src_blocks = 2 * e_tile * 128 * 4                # (E_t, 1) int32 pads to 128 lanes
    dst_blocks = 2 * 8 * e_tile * 4                  # (1, E_t) int32 pads to 8 sublanes
    out_blocks = 2 * o_pad * d_tile * itemsize       # resident / revisited output block
    comb = o_pad * n_tile * 4                        # combined one-hot scratch (f32)
    acc = o_pad * d_tile * 4 if use_acc_scratch else 0
    return x_blocks + src_blocks + dst_blocks + out_blocks + comb + acc


def _make_kernel(use_acc_scratch):
    def kernel(src_ref, dst_ref, x_ref, o_ref, comb_ref, *scratch):
        # src_ref:  (E_t, 1)  int32   gather (source) ids for this E tile, -1 = padding
        # dst_ref:  (1, E_t)  int32   scatter (destination) ids for this E tile, -1 = padding
        # x_ref:    (N_t, D_t)        boundary_x block (fetched from HBM once per (N, D) block)
        # o_ref:    (O_pad, D_t)      output block, resident across the N/E reduction axes
        # comb_ref: (O_pad, N_t) f32  combined scatter@gather one-hot, accumulated over E tiles
        # scratch:  optionally an (O_pad, D_t) f32 accumulator (non-f32 outputs only)
        acc_ref = scratch[0] if use_acc_scratch else o_ref

        ni = pl.program_id(1)
        ei = pl.program_id(2)
        last_n = pl.num_programs(1) - 1
        last_e = pl.num_programs(2) - 1

        e_t = src_ref.shape[0]
        n_t = x_ref.shape[0]
        o_pad = o_ref.shape[0]
        cdt = x_ref.dtype  # bf16 inputs stay on the native bf16 MXU path

        @pl.when(jnp.logical_and(ni == 0, ei == 0))
        def _zero_acc():
            acc_ref[...] = jnp.zeros_like(acc_ref)

        @pl.when(ei == 0)
        def _zero_comb():
            comb_ref[...] = jnp.zeros_like(comb_ref)

        # Gather one-hot (E_t, N_t): fold the N-tile offset into the small (E_t, 1) column so
        # the big lane iota stays loop-invariant (no full-tile VPU add per grid step).
        src_local = src_ref[...] - ni * n_t                           # (E_t, 1); -1 never hits
        lane_iota = lax.broadcasted_iota(jnp.int32, (e_t, n_t), 1)    # loop-invariant
        gather_oh = (src_local == lane_iota).astype(cdt)              # exact 0/1 in bf16

        # Scatter one-hot (O_pad, E_t).
        dst = dst_ref[...]                                            # (1, E_t)
        row_iota = lax.broadcasted_iota(jnp.int32, (o_pad, e_t), 0)   # loop-invariant
        scatter_oh = (row_iota == dst).astype(cdt)

        # Combined one-hot: comb[o, n] = #edges in this tile mapping source row n -> out row o.
        comb_ref[...] += jnp.dot(scatter_oh, gather_oh,
                                 preferred_element_type=jnp.float32)

        # Apply to boundary_x once per (D, N) block, after the E reduction completes.
        @pl.when(ei == last_e)
        def _apply():
            # Counts are small integers -> exact when cast back to bf16 (up to 256 repeats).
            comb = comb_ref[...].astype(cdt)
            acc_ref[...] += jnp.dot(comb, x_ref[...],
                                    preferred_element_type=jnp.float32)

        if use_acc_scratch:
            @pl.when(jnp.logical_and(ni == last_n, ei == last_e))
            def _writeback():
                o_ref[...] = acc_ref[...].astype(o_ref.dtype)

    return kernel


def init_reduce_conv(boundary_x, boundary_index, out_size=None, reduce="add",
                     *, d_cap=None, e_cap=None, n_cap=None):
    """JAX/Pallas equivalent of InitReduceConv.forward for reduce in {'add', 'sum'}.

    Semantics note vs torch_scatter: destination indices outside [0, out_size) contribute
    nothing (PyTorch with an explicit dim_size would error); source indices outside [0, N)
    gather zeros.
    """
    if reduce not in ("add", "sum"):
        # TODO(synk): 'mean'/'min'/'max' scatter reductions not implemented here.
        raise NotImplementedError(f"reduce={reduce!r} not supported")

    assert boundary_index.shape[0] == 2
    n_src, d = boundary_x.shape
    e = boundary_index.shape[1]
    if not jnp.issubdtype(boundary_x.dtype, jnp.floating):
        raise NotImplementedError("only floating-point boundary_x is supported")

    if out_size is None:
        try:
            out_size = int(jax.device_get(boundary_index)[1].max()) + 1
        except Exception as err:  # traced index array (under jit) -> cannot infer statically
            raise ValueError(
                "out_size must be passed explicitly when boundary_index is traced") from err
    out_size = int(out_size)

    # Degenerate inputs: nothing to gather / scatter -> all-zero output.
    if e == 0 or n_src == 0 or d == 0 or out_size == 0:
        return jnp.zeros((out_size, d), boundary_x.dtype)

    itemsize = jnp.dtype(boundary_x.dtype).itemsize
    use_acc_scratch = jnp.dtype(boundary_x.dtype) != jnp.dtype(jnp.float32)

    # ---- generation-aware VMEM budgeting ------------------------------------------------
    try:
        vmem_capacity = int(pltpu.get_tpu_info().vmem_capacity_bytes)
    except Exception:
        vmem_capacity = 0
    if vmem_capacity <= 0:
        vmem_capacity = 64 << 20          # conservative default (v7x per-TensorCore VMEM)
    vmem_limit = min(int(0.75 * vmem_capacity), 112 << 20)
    tile_budget = int(0.5 * vmem_capacity)

    big_vmem = vmem_capacity >= (96 << 20)       # 128 MiB parts (v5e / v6e)
    if d_cap is None:
        d_cap = 1024 if big_vmem else 512
    if e_cap is None:
        e_cap = 1024 if big_vmem else 512
    if n_cap is None:
        n_cap = 512

    o_pad = _round_up(out_size, 16)
    d_tile = _pick_tile(d, d_cap)
    e_tile = _pick_tile(e, e_cap)
    n_tile = _pick_tile(n_src, n_cap)

    # Shrink tiles until resident buffers fit comfortably.
    # TODO(synk): very large out_size additionally needs an O ("parallel") grid axis; here
    # o_pad only scales the resident output block / comb scratch.
    while _vmem_bytes(o_pad, d_tile, e_tile, n_tile, itemsize, use_acc_scratch) > tile_budget:
        if e_tile > 128:
            e_tile = _shrink_128(e_tile)
        elif n_tile > 128:
            n_tile = _shrink_128(n_tile)
        elif d_tile > 128:
            d_tile = _shrink_128(d_tile)
        else:
            break

    # Ensure the "parallel" D axis has >= 2 tiles when possible (both v7x TensorCores work).
    d_pad128 = _round_up(d, 128)
    if d_tile >= d_pad128 and d_pad128 >= 256:
        d_tile = 128 * ((d_pad128 // 128 + 1) // 2)

    d_pad = _round_up(d, d_tile)
    e_pad = _round_up(e, e_tile)
    n_pad = _round_up(n_src, n_tile)

    # Zero-pad inputs so every block tiles evenly and output stores are unmasked.
    x = jnp.zeros((n_pad, d_pad), boundary_x.dtype).at[:n_src, :d].set(boundary_x)
    idx = boundary_index.astype(jnp.int32)
    # -1 padding never matches any iota -> padded edges contribute nothing.
    src_col = jnp.full((e_pad, 1), -1, jnp.int32).at[:e, 0].set(idx[0])
    dst_row = jnp.full((1, e_pad), -1, jnp.int32).at[0, :e].set(idx[1])

    d_tiles = d_pad // d_tile
    n_tiles = n_pad // n_tile
    e_tiles = e_pad // e_tile
    grid = (d_tiles, n_tiles, e_tiles)

    flops = 2 * o_pad * e_pad * n_pad * d_tiles + 2 * o_pad * n_pad * d_pad
    bytes_accessed = int(
        n_pad * d_pad * itemsize                   # boundary_x read exactly once
        + d_tiles * n_tiles * e_pad * 2 * 4        # index tiles (refetched each inner step)
        + o_pad * d_pad * itemsize)                # output

    scratch_shapes = [pltpu.VMEM((o_pad, n_tile), jnp.float32)]
    if use_acc_scratch:
        scratch_shapes.append(pltpu.VMEM((o_pad, d_tile), jnp.float32))

    out_padded = pl.pallas_call(
        _make_kernel(use_acc_scratch),
        out_shape=jax.ShapeDtypeStruct((o_pad, d_pad), boundary_x.dtype),
        grid_spec=pltpu.PrefetchScalarGridSpec(
            num_scalar_prefetch=0,
            grid=grid,
            in_specs=[
                pl.BlockSpec((e_tile, 1), lambda di, ni, ei: (ei, 0)),        # src ids
                pl.BlockSpec((1, e_tile), lambda di, ni, ei: (0, ei)),        # dst ids
                pl.BlockSpec((n_tile, d_tile), lambda di, ni, ei: (ni, di)),  # boundary_x
            ],
            out_specs=pl.BlockSpec((o_pad, d_tile), lambda di, ni, ei: (0, di)),
            scratch_shapes=scratch_shapes,
        ),
        compiler_params=pltpu.CompilerParams(
            dimension_semantics=("parallel", "arbitrary", "arbitrary"),
            vmem_limit_bytes=int(vmem_limit),
        ),
        cost_estimate=pl.CostEstimate(
            flops=int(flops), transcendentals=0, bytes_accessed=bytes_accessed),
    )(src_col, dst_row, x)

    return out_padded[:out_size, :d]


if __name__ == "__main__":
    key = jax.random.PRNGKey(0)
    k_x, k_src, k_dst, k2_x, k2_src, k2_dst = jax.random.split(key, 6)

    # ---- Test 1: small shapes typical for the module (single tile, f32 direct path) ----
    N_SRC, D, E, OUT = 16, 32, 8, 4
    boundary_x = jax.random.normal(k_x, (N_SRC, D), dtype=jnp.float32)
    src_ids = jax.random.randint(k_src, (E,), 0, N_SRC, dtype=jnp.int32)
    dst_ids = jax.random.randint(k_dst, (E,), 0, OUT, dtype=jnp.int32)
    boundary_index = jnp.stack([src_ids, dst_ids], axis=0)  # (2, E)

    out = init_reduce_conv(boundary_x, boundary_index, out_size=OUT, reduce="add")
    out = jax.block_until_ready(out)
    ref = jnp.zeros((OUT, D), jnp.float32).at[dst_ids].add(boundary_x[src_ids])
    assert out.shape == (OUT, D)
    assert out.dtype == boundary_x.dtype
    assert jnp.allclose(out, ref, atol=1e-4, rtol=1e-4), "test 1: mismatch vs reference"

    # ---- Test 2: force multiple D/N/E tiles (128 caps) to exercise both reduction axes ----
    N2, D2, E2, OUT2 = 200, 160, 300, 20
    bx2 = jax.random.normal(k2_x, (N2, D2), dtype=jnp.float32)
    src2 = jax.random.randint(k2_src, (E2,), 0, N2, dtype=jnp.int32)
    dst2 = jax.random.randint(k2_dst, (E2,), 0, OUT2, dtype=jnp.int32)
    bidx2 = jnp.stack([src2, dst2], axis=0)
    out2 = init_reduce_conv(bx2, bidx2, out_size=OUT2, reduce="add",
                            d_cap=128, e_cap=128, n_cap=128)
    out2 = jax.block_until_ready(out2)
    ref2 = jnp.zeros((OUT2, D2), jnp.float32).at[dst2].add(bx2[src2])
    assert out2.shape == (OUT2, D2)
    assert jnp.allclose(out2, ref2, atol=1e-4, rtol=1e-4), "test 2: mismatch vs reference"

    # ---- Test 3: bf16 input exercises the f32-accumulator-scratch / writeback path ----
    bx3 = boundary_x.astype(jnp.bfloat16)
    out3 = init_reduce_conv(bx3, boundary_index, out_size=OUT, reduce="add")
    out3 = jax.block_until_ready(out3)
    ref3 = (jnp.zeros((OUT, D), jnp.float32)
            .at[dst_ids].add(bx3[src_ids].astype(jnp.float32))).astype(jnp.bfloat16)
    assert out3.shape == (OUT, D)
    assert out3.dtype == jnp.bfloat16
    assert jnp.allclose(out3.astype(jnp.float32), ref3.astype(jnp.float32),
                        atol=2e-2, rtol=2e-2), "test 3: mismatch vs reference"

    print("KERNEL_OK")
</pallas_src>

<mosaic_0001>
module attributes {stable_mosaic.version = 11 : i64} {
  func.func @kernel(%arg0: i32, %arg1: i32, %arg2: i32, %arg3: memref<128x1xi32, #tpu.memory_space<vmem>>, %arg4: memref<1x128xi32, #tpu.memory_space<vmem>>, %arg5: memref<128x128xf32, #tpu.memory_space<vmem>>, %arg6: memref<16x128xf32, #tpu.memory_space<vmem>>, %arg7: memref<16x128xf32, #tpu.memory_space<vmem>>) attributes {dimension_semantics = [#tpu.dimension_semantics<parallel>, #tpu.dimension_semantics<arbitrary>, #tpu.dimension_semantics<arbitrary>], iteration_bounds = array<i64: 1, 1, 1>, scalar_prefetch = 0 : i64, scratch_operands = 1 : i64, tpu.core_type = #tpu.core_type<tc>, window_params = [{transform_indices = @transform_0, window_bounds = array<i64: 128, 1>}, {transform_indices = @transform_1, window_bounds = array<i64: 1, 128>}, {transform_indices = @transform_2, window_bounds = array<i64: 128, 128>}, {transform_indices = @transform_3, window_bounds = array<i64: 16, 128>}]} {
    %c0_i32 = arith.constant 0 : i32
    %0 = arith.cmpi eq, %arg1, %c0_i32 : i32
    %c0_i32_0 = arith.constant 0 : i32
    %1 = arith.cmpi eq, %arg2, %c0_i32_0 : i32
    %2 = arith.andi %0, %1 : i1
    %3 = arith.extui %2 : i1 to i32
    %c0_i32_1 = arith.constant 0 : i32
    %4 = arith.cmpi ne, %3, %c0_i32_1 : i32
    scf.if %4 {
      %cst_13 = arith.constant 0.000000e+00 : f32
      %30 = vector.broadcast %cst_13 : f32 to vector<16x128xf32>
      %c0_14 = arith.constant 0 : index
      %c0_15 = arith.constant 0 : index
      %31 = vector.load %arg6[%c0_14, %c0_15] : memref<16x128xf32, #tpu.memory_space<vmem>>, vector<16x128xf32>
      tpu.vector_store %arg6[%c0_14, %c0_15], %30 {strides = array<i32>} : memref<16x128xf32, #tpu.memory_space<vmem>>, vector<16x128xf32>,
    } else {
    }
    %c0_i32_2 = arith.constant 0 : i32
    %5 = arith.cmpi eq, %arg2, %c0_i32_2 : i32
    %6 = arith.extui %5 : i1 to i32
    %c0_i32_3 = arith.constant 0 : i32
    %7 = arith.cmpi ne, %6, %c0_i32_3 : i32
    scf.if %7 {
      %cst_13 = arith.constant 0.000000e+00 : f32
      %30 = vector.broadcast %cst_13 : f32 to vector<16x128xf32>
      %c0_14 = arith.constant 0 : index
      %c0_15 = arith.constant 0 : index
      %31 = vector.load %arg7[%c0_14, %c0_15] : memref<16x128xf32, #tpu.memory_space<vmem>>, vector<16x128xf32>
      tpu.vector_store %arg7[%c0_14, %c0_15], %30 {strides = array<i32>} : memref<16x128xf32, #tpu.memory_space<vmem>>, vector<16x128xf32>,
    } else {
    }
    %c0 = arith.constant 0 : index
    %c0_4 = arith.constant 0 : index
    %8 = vector.load %arg3[%c0, %c0_4] : memref<128x1xi32, #tpu.memory_space<vmem>>, vector<128x1xi32>
    %c128_i32 = arith.constant 128 : i32
    %9 = arith.muli %arg1, %c128_i32 : i32
    %10 = vector.broadcast %9 : i32 to vector<128x1xi32>
    %11 = arith.subi %8, %10 : vector<128x1xi32>
    %12 = tpu.iota {dimensions = array<i32: 1>} : vector<128x128xi32>
    %13 = vector.broadcast %11 : vector<128x1xi32> to vector<128x128xi32>
    %14 = arith.cmpi eq, %13, %12 : vector<128x128xi32>
    %15 = arith.extui %14 : vector<128x128xi1> to vector<128x128xi32>
    %16 = arith.sitofp %15 : vector<128x128xi32> to vector<128x128xf32>
    %c0_5 = arith.constant 0 : index
    %c0_6 = arith.constant 0 : index
    %17 = vector.load %arg4[%c0_5, %c0_6] : memref<1x128xi32, #tpu.memory_space<vmem>>, vector<1x128xi32>
    %18 = tpu.iota {dimensions = array<i32: 0>} : vector<16x128xi32>
    %19 = vector.broadcast %17 : vector<1x128xi32> to vector<16x128xi32>
    %20 = arith.cmpi eq, %18, %19 : vector<16x128xi32>
    %21 = arith.extui %20 : vector<16x128xi1> to vector<16x128xi32>
    %22 = arith.sitofp %21 : vector<16x128xi32> to vector<16x128xf32>
    %c0_7 = arith.constant 0 : index
    %c0_8 = arith.constant 0 : index
    %23 = vector.load %arg7[%c0_7, %c0_8] : memref<16x128xf32, #tpu.memory_space<vmem>>, vector<16x128xf32>
    %cst = arith.constant dense<0.000000e+00> : vector<16x128xf32>
    %24 = tpu.matmul %22, %16, %cst {dimension_numbers = #tpu.dot_dimension_numbers<[1], [0], [0], [1], [0, 0, 1, 1], [], []>} : vector<16x128xf32>, vector<128x128xf32>, vector<16x128xf32> -> vector<16x128xf32>
    %25 = arith.addf %23, %24 : vector<16x128xf32>
    %c0_9 = arith.constant 0 : index
    %c0_10 = arith.constant 0 : index
    %26 = vector.load %arg7[%c0_9, %c0_10] : memref<16x128xf32, #tpu.memory_space<vmem>>, vector<16x128xf32>
    tpu.vector_store %arg7[%c0_9, %c0_10], %25 {strides = array<i32>} : memref<16x128xf32, #tpu.memory_space<vmem>>, vector<16x128xf32>,
    %c0_i32_11 = arith.constant 0 : i32
    %27 = arith.cmpi eq, %arg2, %c0_i32_11 : i32
    %28 = arith.extui %27 : i1 to i32
    %c0_i32_12 = arith.constant 0 : i32
    %29 = arith.cmpi ne, %28, %c0_i32_12 : i32
    scf.if %29 {
      %c0_13 = arith.constant 0 : index
      %c0_14 = arith.constant 0 : index
      %30 = vector.load %arg7[%c0_13, %c0_14] : memref<16x128xf32, #tpu.memory_space<vmem>>, vector<16x128xf32>
      %c0_15 = arith.constant 0 : index
      %c0_16 = arith.constant 0 : index
      %31 = vector.load %arg6[%c0_15, %c0_16] : memref<16x128xf32, #tpu.memory_space<vmem>>, vector<16x128xf32>
      %c0_17 = arith.constant 0 : index
      %c0_18 = arith.constant 0 : index
      %32 = vector.load %arg5[%c0_17, %c0_18] : memref<128x128xf32, #tpu.memory_space<vmem>>, vector<128x128xf32>
      %cst_19 = arith.constant dense<0.000000e+00> : vector<16x128xf32>
      %33 = tpu.matmul %30, %32, %cst_19 {dimension_numbers = #tpu.dot_dimension_numbers<[1], [0], [0], [1], [0, 0, 1, 1], [], []>} : vector<16x128xf32>, vector<128x128xf32>, vector<16x128xf32> -> vector<16x128xf32>
      %34 = arith.addf %31, %33 : vector<16x128xf32>
      %c0_20 = arith.constant 0 : index
      %c0_21 = arith.constant 0 : index
      %35 = vector.load %arg6[%c0_20, %c0_21] : memref<16x128xf32, #tpu.memory_space<vmem>>, vector<16x128xf32>
      tpu.vector_store %arg6[%c0_20, %c0_21], %34 {strides = array<i32>} : memref<16x128xf32, #tpu.memory_space<vmem>>, vector<16x128xf32>,
    } else {
    }
    return
  }
  func.func @transform_0(%arg0: i32, %arg1: i32, %arg2: i32) -> (i32, i32) {
    %c0_i32 = arith.constant 0 : i32
    %c0_i32_0 = arith.constant 0 : i32
    return %arg2, %c0_i32 : i32, i32
  }
  func.func @transform_1(%arg0: i32, %arg1: i32, %arg2: i32) -> (i32, i32) {
    %c0_i32 = arith.constant 0 : i32
    %c0_i32_0 = arith.constant 0 : i32
    return %c0_i32, %arg2 : i32, i32
  }
  func.func @transform_2(%arg0: i32, %arg1: i32, %arg2: i32) -> (i32, i32) {
    %c0_i32 = arith.constant 0 : i32
    return %arg1, %arg0 : i32, i32
  }
  func.func @transform_3(%arg0: i32, %arg1: i32, %arg2: i32) -> (i32, i32) {
    %c0_i32 = arith.constant 0 : i32
    %c0_i32_0 = arith.constant 0 : i32
    return %c0_i32, %arg0 : i32, i32
  }
}

</mosaic_0001>

<llo_original>
// kernel: tpu_custom_call.1
$region0: #{tpu_custom_call.1}
  #allocation0 [shape = 'u32[]', space=smem, size = 0x4, offset = 0x4, fixed_abs, tag = 'smem constant byte address 0x4 - core index']
  #allocation1 [shape = 'u32[72,128]{1,0:T(1,128)}', space=vmem, size = 0x9000, scoped, tag = 'internal scratch']
  #allocation2 [shape = 'f32[16,128]{1,0:T(8,128)}', space=vmem, size = 0x2000, scoped, tag = 'scratch operand']
  %s0 = inlined_call_operand.vmem [shape: s32[128,1], index: 0, kind: input, shape index: {}]
  %s1 = inlined_call_operand.vmem [shape: s32[1,128], index: 1, kind: input, shape index: {}]
  %s2 = inlined_call_operand.vmem [shape: f32[128,128], index: 2, kind: input, shape index: {}]
  %s3 = inlined_call_operand.hbm [shape: f32[16,128], index: 3, kind: output, shape index: {}]
  %s4 = sld [smem:[#allocation0]]
  $region34: #{tpu_custom_call.1} parent=0
    _
  %s6 = ssub.s32 1, %s4
  %s7 = scalar_select 0, %s6, %s4
  $region1: #{tpu_custom_call.1} parent=0
    #allocation3 [shape = 'u8[8192]{0}', space=vmem, size = 0x2000, scoped, tag = 'output window, operand 0, single buffered']
    #allocation4 [shape = 's32[1]{0}', space=sflag, size = 0x4, scoped, tag = 'scoped memory for tpu_custom_call.1']
    %8 = vsyncpa [#allocation4], 0
    // Predicated region
    $region2: #{tpu_custom_call.1} parent=1 // pred_check
      _
    $region3: #{tpu_custom_call.1} parent=1 // pred_check_branch
      %10 = sbr.rel (0) target = $region5
    $region4: #{tpu_custom_call.1} parent=1 // pred_region
      _
    $region5: #{tpu_custom_call.1} parent=1 // pred_fallthru
      _
    // Predicated region
    $region6: #{tpu_custom_call.1} parent=1 // pred_check
      _
    $region7: #{tpu_custom_call.1} parent=1 // pred_check_branch
      %12 = sbr.rel (0) target = $region9
    $region8: #{tpu_custom_call.1} parent=1 // pred_region
      _
    $region9: #{tpu_custom_call.1} parent=1 // pred_fallthru
      _
    // Predicated region
    $region10: #{tpu_custom_call.1} parent=1 // pred_check
      _
    $region11: #{tpu_custom_call.1} parent=1 // pred_check_branch
      %14 = sbr.rel (0) target = $region13
    $region12: #{tpu_custom_call.1} parent=1 // pred_region
      _
    $region13: #{tpu_custom_call.1} parent=1 // pred_fallthru
      _
    %p15 = scmp.eq.s32.totalorder 0, 0
    %p16 = scmp.eq.s32.totalorder 0, 0
    %p17 = pnand %p15, %p16
    %p18 = pneg %p17
    // Predicated region
    $region14: #{tpu_custom_call.1} parent=1 // pred_check
      _
    $region15: #{tpu_custom_call.1} parent=1 // pred_check_branch
      %20 = sbr.rel (%p17) target = $region17
    $region16: #{tpu_custom_call.1} parent=1 // pred_region
      %21 = vst [vmem:[#allocation3] sm:$0xff] 0.0
      %22 = vst [vmem:[#allocation3 + $0x8] sm:$0xff] 0.0
    $region17: #{tpu_custom_call.1} parent=1 // pred_fallthru
      _
    // Predicated region
    $region18: #{tpu_custom_call.1} parent=1 // pred_check
      %p23 = pneg %p16
    $region19: #{tpu_custom_call.1} parent=1 // pred_check_branch
      %25 = sbr.rel (%p23) target = $region21
    $region20: #{tpu_custom_call.1} parent=1 // pred_region
      %26 = vst [vmem:[#allocation2] sm:$0xff] 0.0
      %27 = vst [vmem:[#allocation2 + $0x8] sm:$0xff] 0.0
    $region21: #{tpu_custom_call.1} parent=1 // pred_fallthru
      _
    %v28 = vld [vmem:[%s0] sm:$0xff]
    %v29 = vld [vmem:[%s0 + $0x8] sm:$0xff]
    %v30 = vld [vmem:[%s0 + $0x10] sm:$0xff]
    %v31 = vld [vmem:[%s0 + $0x18] sm:$0xff]
    %v32 = vld [vmem:[%s0 + $0x20] sm:$0xff]
    %v33 = vld [vmem:[%s0 + $0x28] sm:$0xff]
    %v34 = vld [vmem:[%s0 + $0x30] sm:$0xff]
    %v35 = vld [vmem:[%s0 + $0x38] sm:$0xff]
    %v36 = vld [vmem:[%s0 + $0x40] sm:$0xff]
    %v37 = vld [vmem:[%s0 + $0x48] sm:$0xff]
    %v38 = vld [vmem:[%s0 + $0x50] sm:$0xff]
    %v39 = vld [vmem:[%s0 + $0x58] sm:$0xff]
    %v40 = vld [vmem:[%s0 + $0x60] sm:$0xff]
    %v41 = vld [vmem:[%s0 + $0x68] sm:$0xff]
    %v42 = vld [vmem:[%s0 + $0x70] sm:$0xff]
    %v43 = vld [vmem:[%s0 + $0x78] sm:$0xff]
    %s44 = smul.u32 0, 128
    %v45 = vstv %s44
    %v46 = vsub.s32 %v28, %v45
    %v47 = vsub.s32 %v29, %v45
    %v48 = vsub.s32 %v30, %v45
    %v49 = vsub.s32 %v31, %v45
    %v50 = vsub.s32 %v32, %v45
    %v51 = vsub.s32 %v33, %v45
    %v52 = vsub.s32 %v34, %v45
    %v53 = vsub.s32 %v35, %v45
    %v54 = vsub.s32 %v36, %v45
    %v55 = vsub.s32 %v37, %v45
    %v56 = vsub.s32 %v38, %v45
    %v57 = vsub.s32 %v39, %v45
    %v58 = vsub.s32 %v40, %v45
    %v59 = vsub.s32 %v41, %v45
    %v60 = vsub.s32 %v42, %v45
    %v61 = vsub.s32 %v43, %v45
    %v62 = vlaneseq
    %v63 = vand.u32 %v62, 127
    %64 = vset.pattern.permute.xlu0 0
    %65 = vperm.xlu0 %64, %v46
    %v66 = vpop.permute.xlu0 %65
    %67 = vset.pattern.permute.xlu0 0
    %68 = vperm.xlu0 %67, %v47
    %v69 = vpop.permute.xlu0 %68
    %70 = vset.pattern.permute.xlu0 0
    %71 = vperm.xlu0 %70, %v48
    %v72 = vpop.permute.xlu0 %71
    %73 = vset.pattern.permute.xlu0 0
    %74 = vperm.xlu0 %73, %v49
    %v75 = vpop.permute.xlu0 %74
    %76 = vset.pattern.permute.xlu0 0
    %77 = vperm.xlu0 %76, %v50
    %v78 = vpop.permute.xlu0 %77
    %79 = vset.pattern.permute.xlu0 0
    %80 = vperm.xlu0 %79, %v51
    %v81 = vpop.permute.xlu0 %80
    %82 = vset.pattern.permute.xlu0 0
    %83 = vperm.xlu0 %82, %v52
    %v84 = vpop.permute.xlu0 %83
    %85 = vset.pattern.permute.xlu0 0
    %86 = vperm.xlu0 %85, %v53
    %v87 = vpop.permute.xlu0 %86
    %88 = vset.pattern.permute.xlu0 0
    %89 = vperm.xlu0 %88, %v54
    %v90 = vpop.permute.xlu0 %89
    %91 = vset.pattern.permute.xlu0 0
    %92 = vperm.xlu0 %91, %v55
    %v93 = vpop.permute.xlu0 %92
    %94 = vset.pattern.permute.xlu0 0
    %95 = vperm.xlu0 %94, %v56
    %v96 = vpop.permute.xlu0 %95
    %97 = vset.pattern.permute.xlu0 0
    %98 = vperm.xlu0 %97, %v57
    %v99 = vpop.permute.xlu0 %98
    %100 = vset.pattern.permute.xlu0 0
    %101 = vperm.xlu0 %100, %v58
    %v102 = vpop.permute.xlu0 %101
    %103 = vset.pattern.permute.xlu0 0
    %104 = vperm.xlu0 %103, %v59
    %v105 = vpop.permute.xlu0 %104
    %106 = vset.pattern.permute.xlu0 0
    %107 = vperm.xlu0 %106, %v60
    %v108 = vpop.permute.xlu0 %107
    %109 = vset.pattern.permute.xlu0 0
    %110 = vperm.xlu0 %109, %v61
    %v111 = vpop.permute.xlu0 %110
    %vm112 = vcmp.eq.s32.totalorder %v66, %v63
    %vm113 = vcmp.eq.s32.totalorder %v69, %v63
    %vm114 = vcmp.eq.s32.totalorder %v72, %v63
    %vm115 = vcmp.eq.s32.totalorder %v75, %v63
    %vm116 = vcmp.eq.s32.totalorder %v78, %v63
    %vm117 = vcmp.eq.s32.totalorder %v81, %v63
    %vm118 = vcmp.eq.s32.totalorder %v84, %v63
    %vm119 = vcmp.eq.s32.totalorder %v87, %v63
    %vm120 = vcmp.eq.s32.totalorder %v90, %v63
    %vm121 = vcmp.eq.s32.totalorder %v93, %v63
    %vm122 = vcmp.eq.s32.totalorder %v96, %v63
    %vm123 = vcmp.eq.s32.totalorder %v99, %v63
    %vm124 = vcmp.eq.s32.totalorder %v102, %v63
    %vm125 = vcmp.eq.s32.totalorder %v105, %v63
    %vm126 = vcmp.eq.s32.totalorder %v108, %v63
    %vm127 = vcmp.eq.s32.totalorder %v111, %v63
    %v128 = vsel %vm112, 1, 0
    %v129 = vsel %vm113, 1, 0
    %v130 = vsel %vm114, 1, 0
    %v131 = vsel %vm115, 1, 0
    %v132 = vsel %vm116, 1, 0
    %v133 = vsel %vm117, 1, 0
    %v134 = vsel %vm118, 1, 0
    %v135 = vsel %vm119, 1, 0
    %v136 = vsel %vm120, 1, 0
    %v137 = vsel %vm121, 1, 0
    %v138 = vsel %vm122, 1, 0
    %v139 = vsel %vm123, 1, 0
    %v140 = vsel %vm124, 1, 0
    %v141 = vsel %vm125, 1, 0
    %v142 = vsel %vm126, 1, 0
    %v143 = vsel %vm127, 1, 0
    %v144 = vcvt.s32.f32 %v128
    %v145 = vcvt.s32.f32 %v129
    %v146 = vcvt.s32.f32 %v130
    %v147 = vcvt.s32.f32 %v131
    %v148 = vcvt.s32.f32 %v132
    %v149 = vcvt.s32.f32 %v133
    %v150 = vcvt.s32.f32 %v134
    %v151 = vcvt.s32.f32 %v135
    %v152 = vcvt.s32.f32 %v136
    %v153 = vcvt.s32.f32 %v137
    %v154 = vcvt.s32.f32 %v138
    %v155 = vcvt.s32.f32 %v139
    %v156 = vcvt.s32.f32 %v140
    %v157 = vcvt.s32.f32 %v141
    %v158 = vcvt.s32.f32 %v142
    %v159 = vcvt.s32.f32 %v143
    %v160 = vld [vmem:[%s1] sm:$0x1]
    %v161 = vlaneseq
    %v162 = vshrl.u32 %v161, 7
    %v163 = vadd.s32 %v162, 8
    %v164 = vperm.slane %v160, 0
    %vm165 = vcmp.eq.s32.totalorder %v162, %v164
    %vm166 = vcmp.eq.s32.totalorder %v163, %v164
    %v167 = vsel %vm165, 1, 0
    %v168 = vsel %vm166, 1, 0
    %v169 = vcvt.s32.f32 %v167
    %v170 = vcvt.s32.f32 %v168
    %v171 = vld [vmem:[#allocation2] sm:$0xff]
    %v172 = vld [vmem:[#allocation2 + $0x8] sm:$0xff]
    %173 = vmatpush.msra.mxu0 %v159
    %174 = vmatpush.msra.mxu0 %v158
    %175 = vmatpush.msra.mxu0 %v157
    %176 = vmatpush.msra.mxu0 %v156
    %177 = vmatpush.msra.mxu0 %v155
    %178 = vmatpush.msra.mxu0 %v154
    %179 = vmatpush.msra.mxu0 %v153
    %180 = vmatpush.msra.mxu0 %v152
    %181 = vmatpush.msra.mxu0 %v151
    %182 = vmatpush.msra.mxu0 %v150
    %183 = vmatpush.msra.mxu0 %v149
    %184 = vmatpush.msra.mxu0 %v148
    %185 = vmatpush.msra.mxu0 %v147
    %186 = vmatpush.msra.mxu0 %v146
    %187 = vmatpush.msra.mxu0 %v145
    %188 = vmatpush.msra.mxu0 %v144
    %189 = vmatmul.f32.gmra.mxu0 %v169
    %v190 = vpop.f32.mrf.mxu0
    %v191 = vadd.f32 0.0, %v190
    %192 = vmatmul.f32.gmra.mxu0 %v170
    %v193 = vpop.f32.mrf.mxu0
    %v194 = vadd.f32 0.0, %v193
    %195 = vdwg.mxu0
    %v196 = vadd.f32 %v171, %v191
    %v197 = vadd.f32 %v172, %v194
    %198 = vst [vmem:[#allocation2] sm:$0xff] %v196
    %199 = vst [vmem:[#allocation2 + $0x8] sm:$0xff] %v197
    // Predicated region
    $region22: #{tpu_custom_call.1} parent=1 // pred_check
      %p200 = pneg %p16
    $region23: #{tpu_custom_call.1} parent=1 // pred_check_branch
      %202 = sbr.rel (%p200) target = $region25
    $region24: #{tpu_custom_call.1} parent=1 // pred_region
      %v203 = vld [vmem:[#allocation2] sm:$0xff]
      %v204 = vld [vmem:[#allocation2 + $0x8] sm:$0xff]
      %v205 = vld [vmem:[#allocation3] sm:$0xff]
      %v206 = vld [vmem:[#allocation3 + $0x8] sm:$0xff]
      %v207 = vld [vmem:[%s2] sm:$0xff]
      %v208 = vld [vmem:[%s2 + $0x8] sm:$0xff]
      %v209 = vld [vmem:[%s2 + $0x10] sm:$0xff]
      %v210 = vld [vmem:[%s2 + $0x18] sm:$0xff]
      %v211 = vld [vmem:[%s2 + $0x20] sm:$0xff]
      %v212 = vld [vmem:[%s2 + $0x28] sm:$0xff]
      %v213 = vld [vmem:[%s2 + $0x30] sm:$0xff]
      %v214 = vld [vmem:[%s2 + $0x38] sm:$0xff]
      %v215 = vld [vmem:[%s2 + $0x40] sm:$0xff]
      %v216 = vld [vmem:[%s2 + $0x48] sm:$0xff]
      %v217 = vld [vmem:[%s2 + $0x50] sm:$0xff]
      %v218 = vld [vmem:[%s2 + $0x58] sm:$0xff]
      %v219 = vld [vmem:[%s2 + $0x60] sm:$0xff]
      %v220 = vld [vmem:[%s2 + $0x68] sm:$0xff]
      %v221 = vld [vmem:[%s2 + $0x70] sm:$0xff]
      %v222 = vld [vmem:[%s2 + $0x78] sm:$0xff]
      %223 = vmatpush.msra.mxu0 %v222
      %224 = vmatpush.msra.mxu0 %v221
      %225 = vmatpush.msra.mxu0 %v220
      %226 = vmatpush.msra.mxu0 %v219
      %227 = vmatpush.msra.mxu0 %v218
      %228 = vmatpush.msra.mxu0 %v217
      %229 = vmatpush.msra.mxu0 %v216
      %230 = vmatpush.msra.mxu0 %v215
      %231 = vmatpush.msra.mxu0 %v214
      %232 = vmatpush.msra.mxu0 %v213
      %233 = vmatpush.msra.mxu0 %v212
      %234 = vmatpush.msra.mxu0 %v211
      %235 = vmatpush.msra.mxu0 %v210
      %236 = vmatpush.msra.mxu0 %v209
      %237 = vmatpush.msra.mxu0 %v208
      %238 = vmatpush.msra.mxu0 %v207
      %239 = vmatmul.f32.gmra.mxu0 %v203
      %v240 = vpop.f32.mrf.mxu0
      %v241 = vadd.f32 0.0, %v240
      %242 = vmatmul.f32.gmra.mxu0 %v204
      %v243 = vpop.f32.mrf.mxu0
      %v244 = vadd.f32 0.0, %v243
      %245 = vdwg.mxu0
      %v246 = vadd.f32 %v205, %v241
      %v247 = vadd.f32 %v206, %v244
      %248 = vst [vmem:[#allocation3] sm:$0xff] %v246
      %249 = vst [vmem:[#allocation3 + $0x8] sm:$0xff] %v247
    $region25: #{tpu_custom_call.1} parent=1 // pred_fallthru
      _
    // Predicated region
    $region26: #{tpu_custom_call.1} parent=1 // pred_check
      _
    $region27: #{tpu_custom_call.1} parent=1 // pred_check_branch
      %251 = sbr.rel (0) target = $region29
    $region28: #{tpu_custom_call.1} parent=1 // pred_region
      %253 = vsyncadd [#allocation4], 0
      %s254 = sshll.u32 [#allocation3], 4
      %s255 = int_to_ptr.vmem [resolvable:$true] %s254
      %s256 = sshll.u32 %s3, 4
      %s257 = int_to_ptr.hbm [resolvable:$true] %s256
      %262 = dma.vmem_to_hbm [thread:$0]  %s255, 256, %s257, [#allocation4], 128, 128, 8
    $region29: #{tpu_custom_call.1} parent=1 // pred_fallthru
      _
    // Predicated region
    $region30: #{tpu_custom_call.1} parent=1 // pred_check
      _
    $region31: #{tpu_custom_call.1} parent=1 // pred_check_branch
      %264 = sbr.rel (0) target = $region33
    $region32: #{tpu_custom_call.1} parent=1 // pred_region
      %266 = dma.done [#allocation4], 256
    $region33: #{tpu_custom_call.1} parent=1 // pred_fallthru
      _
    %267 = vsyncpa [#allocation4], 1

</llo_original>
